<compile_context>
chip_gen: v7x
topology: tpu7x:2x2x1
jax: 0.10.0
libtpu: 0.0.40
codegen_flags: <defaults>
</compile_context>

<pallas_src>
import jax
import jax.numpy as jnp
from jax import lax
from jax.experimental import pallas as pl
from jax.experimental.pallas import tpu as pltpu

BN_EPS = 1e-5
_LANE = 128


def _head_kernel(x_ref, w_ref, gb_ref, o_ref):
    # x_ref:  (B, C_in)        compute dtype (f32 or bf16)  -- resident across R tiles
    # w_ref:  (tR, C_in)       compute dtype, PyTorch layout (no transpose)
    # gb_ref: (2, tR)          f32; row 0 = gamma, row 1 = beta
    # o_ref:  (B, tR)          f32
    x = x_ref[...]
    w = w_ref[...]

    # Linear (no bias) on the MXU: contract x dim 1 with w dim 1 -> (B, tR).
    fc = lax.dot_general(x, w, (((1,), (1,)), ((), ())),
                         preferred_element_type=jnp.float32)

    # Fused training-mode BatchNorm1d (batch stats, biased variance).
    inv_b = jnp.float32(1.0 / x.shape[0])
    s = jnp.sum(fc, axis=0, keepdims=True)            # (1, tR)
    ss = jnp.sum(fc * fc, axis=0, keepdims=True)      # (1, tR)
    mean = s * inv_b
    var = jnp.maximum(ss * inv_b - mean * mean, 0.0)  # one-pass biased variance
    inv_std = lax.rsqrt(var + BN_EPS)

    gamma = gb_ref[0:1, :]
    beta = gb_ref[1:2, :]
    scale = gamma * inv_std                           # (1, tR)
    shift = beta - mean * scale                       # (1, tR)

    # Single FMA pass over the (B, tR) tensor.
    o_ref[...] = (fc * scale + shift).astype(o_ref.dtype)


def _pick_tile_r(r_pad, b, c_in, x_bytes, w_bytes, budget=12 * 1024 * 1024):
    """Largest R tile (multiple of 128, divides r_pad, <=512) fitting the VMEM budget."""
    def est(t):
        return (2 * b * c_in * x_bytes      # x (pipeline double-buffers it)
                + 2 * t * c_in * w_bytes    # weight tile, double-buffered
                + 2 * b * t * 4             # output tile, double-buffered
                + 2 * 2 * t * 4)            # gamma/beta tile
    if r_pad <= 512 and est(r_pad) <= budget:
        return r_pad
    for t in (512, 384, 256, 128):
        if r_pad % t == 0 and est(t) <= budget:
            return t
    return _LANE  # always divides r_pad (r_pad is a multiple of 128)


def reduction_fc_bn_head(features, linear_weight, bn_gamma, bn_beta):
    """features: (B, C_in, H, W) NCHW.  Returns (B, reduction_dim) float32."""
    B = features.shape[0]
    in_feat = features.shape[1]
    R = linear_weight.shape[0]

    # MXU compute dtype: keep bf16 if upstream is bf16, else f32. Accumulation
    # and the whole BN epilogue stay f32 inside the kernel.
    if features.dtype == jnp.bfloat16 and linear_weight.dtype == jnp.bfloat16:
        compute_dtype = jnp.bfloat16
    else:
        compute_dtype = jnp.float32

    # Glue (plain JAX): the [..., 0, 0] slice; NO weight transpose.
    x = features[..., 0, 0].astype(compute_dtype)            # (B, C_in)
    w = linear_weight.astype(compute_dtype)                  # (R, C_in), PyTorch layout
    gamma = bn_gamma.astype(jnp.float32)
    beta = bn_beta.astype(jnp.float32)

    # Pad R up to a multiple of 128 so the output is lane-dense (unmasked vst).
    # Padded columns are all-zero weight => scale/shift = 0 => output 0; sliced off.
    R_pad = ((R + _LANE - 1) // _LANE) * _LANE
    if R_pad != R:
        w = jnp.pad(w, ((0, R_pad - R), (0, 0)))
        gamma = jnp.pad(gamma, (0, R_pad - R))
        beta = jnp.pad(beta, (0, R_pad - R))

    gb = jnp.stack([gamma, beta], axis=0)                    # (2, R_pad), one small DMA

    x_bytes = jnp.dtype(compute_dtype).itemsize
    tR = _pick_tile_r(R_pad, B, in_feat, x_bytes, x_bytes)
    grid = (R_pad // tR,)

    out = pl.pallas_call(
        _head_kernel,
        out_shape=jax.ShapeDtypeStruct((B, R_pad), jnp.float32),
        grid=grid,
        in_specs=[
            pl.BlockSpec((B, in_feat), lambda i: (0, 0)),    # x resident across R tiles
            pl.BlockSpec((tR, in_feat), lambda i: (i, 0)),   # weight tile (R-major)
            pl.BlockSpec((2, tR), lambda i: (0, i)),         # merged gamma/beta
        ],
        out_specs=pl.BlockSpec((B, tR), lambda i: (0, i)),
        compiler_params=pltpu.CompilerParams(
            dimension_semantics=("parallel",),               # shards R tiles on v7x's 2 TCs
            vmem_limit_bytes=32 * 1024 * 1024,
        ),
    )(x, w, gb)

    if R_pad != R:
        out = out[:, :R]
    return out


def make_params(key, in_feat, reduction_dim, bn_shift=False):
    """Deterministic synthetic parameters matching the module's __init__ shapes."""
    k_w, k_g = jax.random.split(key)
    # nn.Linear(in_feat, reduction_dim, bias=False).weight : (reduction_dim, in_feat)
    bound = 1.0 / jnp.sqrt(jnp.float32(in_feat))
    linear_weight = jax.random.uniform(
        k_w, (reduction_dim, in_feat), jnp.float32, minval=-bound, maxval=bound)
    # weights_init_kaiming on BatchNorm1d: weight ~ N(1.0, 0.01), bias = 0.
    bn_gamma = 1.0 + 0.01 * jax.random.normal(k_g, (reduction_dim,), jnp.float32)
    bn_beta = jnp.zeros((reduction_dim,), jnp.float32)  # frozen when not bn_shift
    del bn_shift
    return linear_weight, bn_gamma, bn_beta


def _reference(features, linear_weight, bn_gamma, bn_beta):
    x = features[..., 0, 0].astype(jnp.float32)
    fc = x @ linear_weight.T
    mean = jnp.mean(fc, axis=0, keepdims=True)
    var = jnp.mean((fc - mean) ** 2, axis=0, keepdims=True)
    return (fc - mean) / jnp.sqrt(var + BN_EPS) * bn_gamma[None, :] + bn_beta[None, :]


if __name__ == "__main__":
    B, in_feat, H, W = 2, 32, 4, 4
    reduction_dim = 64

    key = jax.random.PRNGKey(0)
    k_x, k_p = jax.random.split(key)
    features = jax.random.normal(k_x, (B, in_feat, H, W), jnp.float32)
    linear_weight, bn_gamma, bn_beta = make_params(k_p, in_feat, reduction_dim)

    out = reduction_fc_bn_head(features, linear_weight, bn_gamma, bn_beta)
    out = jax.block_until_ready(out)

    ref = _reference(features, linear_weight, bn_gamma, bn_beta)
    assert out.shape == (B, reduction_dim)
    assert jnp.max(jnp.abs(out - ref)) < 1e-4, "mismatch vs reference"

    print("KERNEL_OK")
</pallas_src>

<mosaic_0001>
module attributes {stable_mosaic.version = 11 : i64} {
  func.func @_head_kernel(%arg0: i32, %arg1: memref<2x32xf32, #tpu.memory_space<vmem>>, %arg2: memref<128x32xf32, #tpu.memory_space<vmem>>, %arg3: memref<2x128xf32, #tpu.memory_space<vmem>>, %arg4: memref<2x128xf32, #tpu.memory_space<vmem>>) attributes {dimension_semantics = [#tpu.dimension_semantics<parallel>], iteration_bounds = array<i64: 1>, scalar_prefetch = 0 : i64, scratch_operands = 0 : i64, tpu.core_type = #tpu.core_type<tc>, window_params = [{pipeline_mode = #tpu.pipeline_mode<synchronous>, transform_indices = @transform_0, window_bounds = array<i64: 2, 32>}, {transform_indices = @transform_1, window_bounds = array<i64: 128, 32>}, {transform_indices = @transform_2, window_bounds = array<i64: 2, 128>}, {transform_indices = @transform_3, window_bounds = array<i64: 2, 128>}]} {
    %c0 = arith.constant 0 : index
    %c0_0 = arith.constant 0 : index
    %0 = vector.load %arg1[%c0, %c0_0] : memref<2x32xf32, #tpu.memory_space<vmem>>, vector<2x32xf32>
    %c0_1 = arith.constant 0 : index
    %c0_2 = arith.constant 0 : index
    %1 = vector.load %arg2[%c0_1, %c0_2] : memref<128x32xf32, #tpu.memory_space<vmem>>, vector<128x32xf32>
    %cst = arith.constant dense<0.000000e+00> : vector<2x128xf32>
    %2 = tpu.matmul %0, %1, %cst {dimension_numbers = #tpu.dot_dimension_numbers<[1], [1], [0], [0], [0, 0, 1, 0], [], []>} : vector<2x32xf32>, vector<128x32xf32>, vector<2x128xf32> -> vector<2x128xf32>
    %cst_3 = arith.constant dense<0.000000e+00> : vector<128xf32>
    %3 = vector.multi_reduction <add>, %2, %cst_3 [0] : vector<2x128xf32> to vector<128xf32>
    %4 = vector.shape_cast %3 : vector<128xf32> to vector<1x128xf32>
    %5 = arith.mulf %2, %2 : vector<2x128xf32>
    %cst_4 = arith.constant dense<0.000000e+00> : vector<128xf32>
    %6 = vector.multi_reduction <add>, %5, %cst_4 [0] : vector<2x128xf32> to vector<128xf32>
    %7 = vector.shape_cast %6 : vector<128xf32> to vector<1x128xf32>
    %cst_5 = arith.constant 5.000000e-01 : f32
    %8 = vector.broadcast %cst_5 : f32 to vector<1x128xf32>
    %9 = arith.mulf %4, %8 : vector<1x128xf32>
    %cst_6 = arith.constant 5.000000e-01 : f32
    %10 = vector.broadcast %cst_6 : f32 to vector<1x128xf32>
    %11 = arith.mulf %7, %10 : vector<1x128xf32>
    %12 = arith.mulf %9, %9 : vector<1x128xf32>
    %13 = arith.subf %11, %12 : vector<1x128xf32>
    %cst_7 = arith.constant 0.000000e+00 : f32
    %14 = vector.broadcast %cst_7 : f32 to vector<1x128xf32>
    %15 = arith.maximumf %13, %14 : vector<1x128xf32>
    %cst_8 = arith.constant 9.99999974E-6 : f32
    %16 = vector.broadcast %cst_8 : f32 to vector<1x128xf32>
    %17 = arith.addf %15, %16 : vector<1x128xf32>
    %18 = math.rsqrt %17 : vector<1x128xf32>
    %c0_9 = arith.constant 0 : index
    %c0_10 = arith.constant 0 : index
    %19 = vector.load %arg3[%c0_9, %c0_10] : memref<2x128xf32, #tpu.memory_space<vmem>>, vector<1x128xf32>
    %c1 = arith.constant 1 : index
    %c0_11 = arith.constant 0 : index
    %20 = vector.load %arg3[%c1, %c0_11] : memref<2x128xf32, #tpu.memory_space<vmem>>, vector<1x128xf32>
    %21 = arith.mulf %19, %18 : vector<1x128xf32>
    %22 = arith.mulf %9, %21 : vector<1x128xf32>
    %23 = arith.subf %20, %22 : vector<1x128xf32>
    %24 = vector.broadcast %21 : vector<1x128xf32> to vector<2x128xf32>
    %25 = arith.mulf %2, %24 : vector<2x128xf32>
    %26 = vector.broadcast %23 : vector<1x128xf32> to vector<2x128xf32>
    %27 = arith.addf %25, %26 : vector<2x128xf32>
    %c0_12 = arith.constant 0 : index
    %c0_13 = arith.constant 0 : index
    %28 = vector.load %arg4[%c0_12, %c0_13] : memref<2x128xf32, #tpu.memory_space<vmem>>, vector<2x128xf32>
    tpu.vector_store %arg4[%c0_12, %c0_13], %27 {strides = array<i32>} : memref<2x128xf32, #tpu.memory_space<vmem>>, vector<2x128xf32>,
    return
  }
  func.func @transform_0(%arg0: i32) -> (i32, i32) {
    %c0_i32 = arith.constant 0 : i32
    %c0_i32_0 = arith.constant 0 : i32
    %c0_i32_1 = arith.constant 0 : i32
    return %c0_i32, %c0_i32_0 : i32, i32
  }
  func.func @transform_1(%arg0: i32) -> (i32, i32) {
    %c0_i32 = arith.constant 0 : i32
    %c0_i32_0 = arith.constant 0 : i32
    return %arg0, %c0_i32 : i32, i32
  }
  func.func @transform_2(%arg0: i32) -> (i32, i32) {
    %c0_i32 = arith.constant 0 : i32
    %c0_i32_0 = arith.constant 0 : i32
    return %c0_i32, %arg0 : i32, i32
  }
  func.func @transform_3(%arg0: i32) -> (i32, i32) {
    %c0_i32 = arith.constant 0 : i32
    %c0_i32_0 = arith.constant 0 : i32
    return %c0_i32, %arg0 : i32, i32
  }
}

</mosaic_0001>

<llo_original>
// kernel: tpu_custom_call.1
$region0: #{tpu_custom_call.1}
  #allocation0 [shape = 'u32[]', space=smem, size = 0x4, offset = 0x4, fixed_abs, tag = 'smem constant byte address 0x4 - core index']
  #allocation1 [shape = 'u32[144,128]{1,0:T(1,128)}', space=vmem, size = 0x12000, scoped, tag = 'internal scratch']
  %s0 = inlined_call_operand.vmem [shape: f32[2,32], index: 0, kind: input, shape index: {}]
  %s1 = inlined_call_operand.vmem [shape: f32[128,32], index: 1, kind: input, shape index: {}]
  %s2 = inlined_call_operand.vmem [shape: f32[2,128], index: 2, kind: input, shape index: {}]
  %s3 = inlined_call_operand.hbm [shape: f32[2,128], index: 3, kind: output, shape index: {}]
  %s4 = sld [smem:[#allocation0]]
  $region22: #{tpu_custom_call.1} parent=0
    _
  %s6 = ssub.s32 1, %s4
  %s7 = scalar_select 0, %s6, %s4
  $region1: #{tpu_custom_call.1} parent=0
    #allocation2 [shape = 'u8[1024]{0}', space=vmem, size = 0x400, scoped, tag = 'output window, operand 0, single buffered']
    #allocation3 [shape = 's32[1]{0}', space=sflag, size = 0x4, scoped, tag = 'scoped memory for tpu_custom_call.1']
    %8 = vsyncpa [#allocation3], 0
    // Predicated region
    $region2: #{tpu_custom_call.1} parent=1 // pred_check
      _
    $region3: #{tpu_custom_call.1} parent=1 // pred_check_branch
      %10 = sbr.rel (0) target = $region5
    $region4: #{tpu_custom_call.1} parent=1 // pred_region
      _
    $region5: #{tpu_custom_call.1} parent=1 // pred_fallthru
      _
    // Predicated region
    $region6: #{tpu_custom_call.1} parent=1 // pred_check
      _
    $region7: #{tpu_custom_call.1} parent=1 // pred_check_branch
      %12 = sbr.rel (0) target = $region9
    $region8: #{tpu_custom_call.1} parent=1 // pred_region
      _
    $region9: #{tpu_custom_call.1} parent=1 // pred_fallthru
      _
    // Predicated region
    $region10: #{tpu_custom_call.1} parent=1 // pred_check
      _
    $region11: #{tpu_custom_call.1} parent=1 // pred_check_branch
      %14 = sbr.rel (0) target = $region13
    $region12: #{tpu_custom_call.1} parent=1 // pred_region
      _
    $region13: #{tpu_custom_call.1} parent=1 // pred_fallthru
      _
    %v15 = vld [vmem:[%s0] sm:$0x3]
    %v16 = vld [vmem:[%s1] sm:$0xff]
    %v17 = vld [vmem:[%s1 + $0x8] sm:$0xff]
    %v18 = vld [vmem:[%s1 + $0x10] sm:$0xff]
    %v19 = vld [vmem:[%s1 + $0x18] sm:$0xff]
    %v20 = vld [vmem:[%s1 + $0x20] sm:$0xff]
    %v21 = vld [vmem:[%s1 + $0x28] sm:$0xff]
    %v22 = vld [vmem:[%s1 + $0x30] sm:$0xff]
    %v23 = vld [vmem:[%s1 + $0x38] sm:$0xff]
    %v24 = vld [vmem:[%s1 + $0x40] sm:$0xff]
    %v25 = vld [vmem:[%s1 + $0x48] sm:$0xff]
    %v26 = vld [vmem:[%s1 + $0x50] sm:$0xff]
    %v27 = vld [vmem:[%s1 + $0x58] sm:$0xff]
    %v28 = vld [vmem:[%s1 + $0x60] sm:$0xff]
    %v29 = vld [vmem:[%s1 + $0x68] sm:$0xff]
    %v30 = vld [vmem:[%s1 + $0x70] sm:$0xff]
    %v31 = vld [vmem:[%s1 + $0x78] sm:$0xff]
    %vm32 = vcmask 261120
    %v34 = vsel %vm32, %v15, 0
    %v37 = vsel %vm32, %v16, 0
    %v40 = vsel %vm32, %v17, 0
    %v43 = vsel %vm32, %v18, 0
    %v46 = vsel %vm32, %v19, 0
    %v49 = vsel %vm32, %v20, 0
    %v52 = vsel %vm32, %v21, 0
    %v55 = vsel %vm32, %v22, 0
    %v58 = vsel %vm32, %v23, 0
    %v61 = vsel %vm32, %v24, 0
    %v64 = vsel %vm32, %v25, 0
    %v67 = vsel %vm32, %v26, 0
    %v70 = vsel %vm32, %v27, 0
    %v73 = vsel %vm32, %v28, 0
    %v76 = vsel %vm32, %v29, 0
    %v79 = vsel %vm32, %v30, 0
    %v82 = vsel %vm32, %v31, 0
    %84 = vmatprep.subr.mxu0 0.0
    %85 = vmatpush1.xpose.msra.mxu0 %v37
    %86 = vmatprep.subr.mxu0 0.0
    %87 = vmatpush1.xpose.msra.mxu0 %v40
    %88 = vmatprep.subr.mxu0 0.0
    %89 = vmatpush1.xpose.msra.mxu0 %v43
    %90 = vmatprep.subr.mxu0 0.0
    %91 = vmatpush1.xpose.msra.mxu0 %v46
    %92 = vmatprep.subr.mxu0 0.0
    %93 = vmatpush1.xpose.msra.mxu0 %v49
    %94 = vmatprep.subr.mxu0 0.0
    %95 = vmatpush1.xpose.msra.mxu0 %v52
    %96 = vmatprep.subr.mxu0 0.0
    %97 = vmatpush1.xpose.msra.mxu0 %v55
    %98 = vmatprep.subr.mxu0 0.0
    %99 = vmatpush1.xpose.msra.mxu0 %v58
    %100 = vmatprep.subr.mxu0 0.0
    %101 = vmatpush1.xpose.msra.mxu0 %v61
    %102 = vmatprep.subr.mxu0 0.0
    %103 = vmatpush1.xpose.msra.mxu0 %v64
    %104 = vmatprep.subr.mxu0 0.0
    %105 = vmatpush1.xpose.msra.mxu0 %v67
    %106 = vmatprep.subr.mxu0 0.0
    %107 = vmatpush1.xpose.msra.mxu0 %v70
    %108 = vmatprep.subr.mxu0 0.0
    %109 = vmatpush1.xpose.msra.mxu0 %v73
    %110 = vmatprep.subr.mxu0 0.0
    %111 = vmatpush1.xpose.msra.mxu0 %v76
    %112 = vmatprep.subr.mxu0 0.0
    %113 = vmatpush1.xpose.msra.mxu0 %v79
    %114 = vmatprep.subr.mxu0 0.0
    %115 = vmatpush1.xpose.msra.mxu0 %v82
    %116 = vmatprep.subr.mxu0 0.0
    %117 = vmatpush1.xpose.msra.mxu0 0.0
    %118 = vmatprep.subr.mxu0 0.0
    %119 = vmatpush1.xpose.msra.mxu0 0.0
    %120 = vmatprep.subr.mxu0 0.0
    %121 = vmatpush1.xpose.msra.mxu0 0.0
    %122 = vmatprep.subr.mxu0 0.0
    %123 = vmatpush1.xpose.msra.mxu0 0.0
    %124 = vmatprep.subr.mxu0 0.0
    %125 = vmatpush1.xpose.msra.mxu0 0.0
    %126 = vmatprep.subr.mxu0 0.0
    %127 = vmatpush1.xpose.msra.mxu0 0.0
    %128 = vmatprep.subr.mxu0 0.0
    %129 = vmatpush1.xpose.msra.mxu0 0.0
    %130 = vmatprep.subr.mxu0 0.0
    %131 = vmatpush1.xpose.msra.mxu0 0.0
    %132 = vmatprep.subr.mxu0 0.0
    %133 = vmatpush1.xpose.msra.mxu0 0.0
    %134 = vmatprep.subr.mxu0 0.0
    %135 = vmatpush1.xpose.msra.mxu0 0.0
    %136 = vmatprep.subr.mxu0 0.0
    %137 = vmatpush1.xpose.msra.mxu0 0.0
    %138 = vmatprep.subr.mxu0 0.0
    %139 = vmatpush1.xpose.msra.mxu0 0.0
    %140 = vmatprep.subr.mxu0 0.0
    %141 = vmatpush1.xpose.msra.mxu0 0.0
    %142 = vmatprep.subr.mxu0 0.0
    %143 = vmatpush1.xpose.msra.mxu0 0.0
    %144 = vmatprep.subr.mxu0 0.0
    %145 = vmatpush1.xpose.msra.mxu0 0.0
    %146 = vmatprep.subr.mxu0 0.0
    %147 = vmatpush1.xpose.msra.mxu0 0.0
    %148 = vmatprep.mubr.f32.mxu0 0.0
    %149 = vmatmul.mubr.f32.gmra.mrb[0].mxu0 %v34
    %v150 = vpop.f32.mrb[0].mxu0
    %v151 = vadd.f32 0.0, %v150
    %v152 = vpop.f32.mrb[0].mxu0
    %153 = vdwg.mxu0
    %vm154 = vcmask 1041408
    %v155 = vsel %vm154, %v151, 0.0
    %v156 = vrot.slane %v155, 4
    %v157 = vadd.f32 %v155, %v156
    %v158 = vrot.slane %v157, 2
    %v159 = vadd.f32 %v157, %v158
    %v160 = vrot.slane %v159, 1
    %v161 = vadd.f32 %v159, %v160
    %v162 = vmul.f32 %v151, %v151
    %v163 = vsel %vm154, %v162, 0.0
    %v164 = vrot.slane %v163, 4
    %v165 = vadd.f32 %v163, %v164
    %v166 = vrot.slane %v165, 2
    %v167 = vadd.f32 %v165, %v166
    %v168 = vrot.slane %v167, 1
    %v169 = vadd.f32 %v167, %v168
    %v170 = vmul.f32 %v161, 0.5
    %v171 = vmul.f32 %v169, 0.5
    %v172 = vmul.f32 %v170, %v170
    %v173 = vsub.f32 %v171, %v172
    %v174 = vmax.f32 %v173, 0.0
    %v175 = vadd.f32 %v174, 1e-05
    %v176 = vrsqrt.pop %v175
    %v177 = vld [vmem:[%s2] sm:$0x1]
    %v178 = vld [vmem:[%s2 + $0x1] sm:$0x1]
    %v179 = vmul.f32 %v177, %v176
    %v180 = vmul.f32 %v170, %v179
    %v181 = vsub.f32 %v178, %v180
    %v182 = vlaneseq
    %v183 = vshrl.u32 %v182, 7
    %v184 = vsub.s32 0, %v183
    %v185 = vrot.slane %v179, %v184
    %v186 = vmul.f32 %v151, %v185
    %v187 = vlaneseq
    %v188 = vshrl.u32 %v187, 7
    %v189 = vsub.s32 0, %v188
    %v190 = vrot.slane %v181, %v189
    %v191 = vadd.f32 %v186, %v190
    %192 = vst [vmem:[#allocation2] sm:$0x3] %v191
    // Predicated region
    $region14: #{tpu_custom_call.1} parent=1 // pred_check
      _
    $region15: #{tpu_custom_call.1} parent=1 // pred_check_branch
      %194 = sbr.rel (0) target = $region17
    $region16: #{tpu_custom_call.1} parent=1 // pred_region
      %s196 = ssub.s32 32, 32
      %197 = vsyncadd [#allocation3], %s196
      %s199 = sshll.u32 [#allocation2], 4
      %s200 = int_to_ptr.vmem [resolvable:$true] %s199
      %202 = dma.vmem_to_hbm [thread:$0]  %s200, 32, %s3, [#allocation3]
    $region17: #{tpu_custom_call.1} parent=1 // pred_fallthru
      _
    // Predicated region
    $region18: #{tpu_custom_call.1} parent=1 // pred_check
      _
    $region19: #{tpu_custom_call.1} parent=1 // pred_check_branch
      %204 = sbr.rel (0) target = $region21
    $region20: #{tpu_custom_call.1} parent=1 // pred_region
      %205 = dma.done [#allocation3], 32
    $region21: #{tpu_custom_call.1} parent=1 // pred_fallthru
      _
    %206 = vsyncpa [#allocation3], 1

</llo_original>
